<compile_context>
chip_gen: v7x
topology: tpu7x:2x2x1
jax: 0.10.0
libtpu: 0.0.40
codegen_flags: <defaults>
</compile_context>

<pallas_src>
import functools

import jax
import jax.numpy as jnp
from jax import lax
from jax.experimental import pallas as pl
from jax.experimental.pallas import tpu as pltpu


VMEM_LIMIT_BYTES = 64 * 1024 * 1024   # raised scoped-VMEM limit; <= physical on all gens
NEG_INF = -1e30                       # finite mask value keeps online softmax NaN-free


# ----------------------------- tiny deterministic config -----------------------------
class Cfg:
    vocab_size = 128
    hidden_size = 128
    num_attention_heads = 4
    num_key_value_heads = 2
    intermediate_size = 256          # dense-layer MLP intermediate
    moe_intermediate_size = 128      # per-expert MLP intermediate
    n_routed_experts = 4
    num_experts_per_tok = 2
    n_shared_experts = 1
    norm_topk_prob = True
    num_hidden_layers = 2
    first_k_dense_replace = 1        # layer 0 dense MLP, layer 1 MoE
    moe_layer_freq = 1
    rms_norm_eps = 1e-6
    rope_theta = 10000.0


def _pick_tile(n, candidates=(512, 256, 128)):
    """Largest 128-granular tile that divides n, else the full dim (toy shapes)."""
    for c in candidates:
        if n % c == 0:
            return c
    return n


def _cparams(*dimension_semantics):
    return pltpu.CompilerParams(
        dimension_semantics=tuple(dimension_semantics),
        vmem_limit_bytes=VMEM_LIMIT_BYTES,
    )


# ----------------------------- tiled linear (bf16 MXU, f32 accum) -----------------------------
def _matmul_kernel(x_ref, w_ref, o_ref, acc_ref):
    @pl.when(pl.program_id(2) == 0)
    def _():
        acc_ref[...] = jnp.zeros_like(acc_ref)

    acc_ref[...] += jnp.dot(
        x_ref[...].astype(jnp.bfloat16), w_ref[...],
        preferred_element_type=jnp.float32)

    @pl.when(pl.program_id(2) == pl.num_programs(2) - 1)
    def _():
        o_ref[...] = acc_ref[...]


def linear(x, w):
    """y = x @ w ; x f32 [M,K], w bf16 [K,N] (torch [out,in] weight pre-transposed)."""
    m, k = x.shape
    n = w.shape[1]
    bm, bn, bk = _pick_tile(m), _pick_tile(n), _pick_tile(k)
    return pl.pallas_call(
        _matmul_kernel,
        grid=(m // bm, n // bn, k // bk),
        in_specs=[pl.BlockSpec((bm, bk), lambda i, j, kk: (i, kk)),
                  pl.BlockSpec((bk, bn), lambda i, j, kk: (kk, j))],
        out_specs=pl.BlockSpec((bm, bn), lambda i, j, kk: (i, j)),
        out_shape=jax.ShapeDtypeStruct((m, n), jnp.float32),
        scratch_shapes=[pltpu.VMEM((bm, bn), jnp.float32)],
        compiler_params=_cparams("parallel", "parallel", "arbitrary"),
    )(x, w)


# ----------------------------- RMSNorm kernels (f32 VPU/EUP) -----------------------------
def _rmsnorm_kernel(eps, x_ref, w_ref, o_ref):
    x = x_ref[...]
    var = jnp.mean(x * x, axis=-1, keepdims=True)
    o_ref[...] = x * lax.rsqrt(var + eps) * w_ref[...]


def rmsnorm(x, w, eps):
    return pl.pallas_call(
        functools.partial(_rmsnorm_kernel, eps),
        out_shape=jax.ShapeDtypeStruct(x.shape, jnp.float32),
    )(x, w[None, :])


def _fused_add_rmsnorm_kernel(eps, x_ref, r_ref, w_ref, h_ref, res_ref):
    r = x_ref[...] + r_ref[...]
    res_ref[...] = r
    var = jnp.mean(r * r, axis=-1, keepdims=True)
    h_ref[...] = r * lax.rsqrt(var + eps) * w_ref[...]


def fused_add_rmsnorm(x, residual, w, eps):
    h, r = pl.pallas_call(
        functools.partial(_fused_add_rmsnorm_kernel, eps),
        out_shape=(jax.ShapeDtypeStruct(x.shape, jnp.float32),
                   jax.ShapeDtypeStruct(x.shape, jnp.float32)),
    )(x, residual, w[None, :])
    return h, r


# ----------------------------- RoPE on the packed qkv tensor -----------------------------
def _rope_qkv_kernel(q_size, x_ref, cos_ref, sin_ref, rot_ref, q_ref, kv_ref):
    # x: [tm, W] = [q | k | v] token-major, lane-dense.
    # rotate-half realized as a signed block-diagonal permutation matrix (exact in f32):
    #   roped = x * cos + (x @ R) * sin     (cos=1 / sin=0 / R=0 over the v columns)
    x = x_ref[...]
    rot = jnp.dot(x, rot_ref[...], preferred_element_type=jnp.float32)
    roped = x * cos_ref[...] + rot * sin_ref[...]
    q_ref[...] = roped[:, :q_size]
    kv_ref[...] = roped[:, q_size:]


def apply_rope_qkv(qkv, cos_w, sin_w, rot, q_size, kv_size):
    t, width = qkv.shape
    bm = _pick_tile(t)
    return pl.pallas_call(
        functools.partial(_rope_qkv_kernel, q_size),
        grid=(t // bm,),
        in_specs=[pl.BlockSpec((bm, width), lambda i: (i, 0)),
                  pl.BlockSpec((bm, width), lambda i: (i, 0)),
                  pl.BlockSpec((bm, width), lambda i: (i, 0)),
                  pl.BlockSpec((width, width), lambda i: (0, 0))],
        out_specs=(pl.BlockSpec((bm, q_size), lambda i: (i, 0)),
                   pl.BlockSpec((bm, 2 * kv_size), lambda i: (i, 0))),
        out_shape=(jax.ShapeDtypeStruct((t, q_size), jnp.float32),
                   jax.ShapeDtypeStruct((t, 2 * kv_size), jnp.float32)),
        compiler_params=_cparams("parallel"),
    )(qkv, cos_w, sin_w, rot)


# ----------------------------- flash-style causal GQA attention -----------------------------
def _attn_kernel(scale, num_heads, num_kv_heads, head_dim, tq, tkv,
                 q_ref, kv_ref, o_ref, m_ref, l_ref, acc_ref):
    qi = pl.program_id(0)
    ki = pl.program_id(1)
    group = num_heads // num_kv_heads
    kv_size = num_kv_heads * head_dim

    @pl.when(ki == 0)
    def _():
        m_ref[...] = jnp.full_like(m_ref, NEG_INF)
        l_ref[...] = jnp.zeros_like(l_ref)
        acc_ref[...] = jnp.zeros_like(acc_ref)

    q_pos = qi * tq + lax.broadcasted_iota(jnp.int32, (tq, tkv), 0)
    k_pos = ki * tkv + lax.broadcasted_iota(jnp.int32, (tq, tkv), 1)
    causal = q_pos >= k_pos

    q_all = q_ref[...]       # [tq, num_heads*head_dim]   (already RoPE'd)
    kv_all = kv_ref[...]     # [tkv, 2*kv_size] = [k | v] (k already RoPE'd)

    for h in range(num_heads):        # static unroll; each kv head RoPE'd only once upstream
        g = h // group
        q_h = q_all[:, h * head_dim:(h + 1) * head_dim].astype(jnp.bfloat16)
        k_h = kv_all[:, g * head_dim:(g + 1) * head_dim].astype(jnp.bfloat16)
        v_h = kv_all[:, kv_size + g * head_dim:
                     kv_size + (g + 1) * head_dim].astype(jnp.bfloat16)

        s = jnp.einsum("qd,kd->qk", q_h, k_h,
                       preferred_element_type=jnp.float32) * scale
        s = jnp.where(causal, s, NEG_INF)

        m_prev = m_ref[h]                                     # [tq, 1]
        m_new = jnp.maximum(m_prev, jnp.max(s, axis=-1, keepdims=True))
        alpha = jnp.exp(m_prev - m_new)
        p = jnp.exp(s - m_new)
        l_ref[h] = alpha * l_ref[h] + jnp.sum(p, axis=-1, keepdims=True)
        acc_ref[h] = alpha * acc_ref[h] + jnp.dot(
            p.astype(jnp.bfloat16), v_h, preferred_element_type=jnp.float32)
        m_ref[h] = m_new

    @pl.when(ki == pl.num_programs(1) - 1)
    def _():
        outs = []
        for h in range(num_heads):
            inv_l = pl.reciprocal(l_ref[h], approx=True)
            outs.append(acc_ref[h] * inv_l)
        # single lane-dense [tq, num_heads*head_dim] store, token-major: no output transpose
        o_ref[...] = jnp.concatenate(outs, axis=-1)


def attention(q, kv, num_heads, num_kv_heads, head_dim):
    t = q.shape[0]
    q_size = num_heads * head_dim
    kv_size = num_kv_heads * head_dim
    tq = 128 if t % 128 == 0 else t
    tkv = 128 if t % 128 == 0 else t
    scale = head_dim ** -0.5
    kernel = functools.partial(_attn_kernel, scale, num_heads, num_kv_heads,
                               head_dim, tq, tkv)
    return pl.pallas_call(
        kernel,
        grid=(t // tq, t // tkv),
        in_specs=[pl.BlockSpec((tq, q_size), lambda qi, ki: (qi, 0)),
                  pl.BlockSpec((tkv, 2 * kv_size), lambda qi, ki: (ki, 0))],
        out_specs=pl.BlockSpec((tq, q_size), lambda qi, ki: (qi, 0)),
        out_shape=jax.ShapeDtypeStruct((t, q_size), jnp.float32),
        scratch_shapes=[pltpu.VMEM((num_heads, tq, 1), jnp.float32),
                        pltpu.VMEM((num_heads, tq, 1), jnp.float32),
                        pltpu.VMEM((num_heads, tq, head_dim), jnp.float32)],
        compiler_params=_cparams("parallel", "arbitrary"),
    )(q, kv)


# ----------------------------- fused SwiGLU MLP (intermediate-tiled) -----------------------------
def _mlp_kernel(x_ref, wg_ref, wu_ref, wd_ref, o_ref, acc_ref):
    j = pl.program_id(1)

    @pl.when(j == 0)
    def _():
        acc_ref[...] = jnp.zeros_like(acc_ref)

    xb = x_ref[...].astype(jnp.bfloat16)
    gate = jnp.dot(xb, wg_ref[...], preferred_element_type=jnp.float32)
    up = jnp.dot(xb, wu_ref[...], preferred_element_type=jnp.float32)
    act = gate * jax.nn.sigmoid(gate) * up                       # SiluAndMul, f32 VPU/EUP
    acc_ref[...] += jnp.dot(act.astype(jnp.bfloat16), wd_ref[...],
                            preferred_element_type=jnp.float32)

    @pl.when(j == pl.num_programs(1) - 1)
    def _():
        o_ref[...] = acc_ref[...]


def mlp(x, w_gate, w_up, w_down):
    t, h = x.shape
    inter = w_gate.shape[1]
    bm = _pick_tile(t)
    ti = _pick_tile(inter)
    return pl.pallas_call(
        _mlp_kernel,
        grid=(t // bm, inter // ti),
        in_specs=[pl.BlockSpec((bm, h), lambda i, j: (i, 0)),
                  pl.BlockSpec((h, ti), lambda i, j: (0, j)),
                  pl.BlockSpec((h, ti), lambda i, j: (0, j)),
                  pl.BlockSpec((ti, h), lambda i, j: (j, 0))],
        out_specs=pl.BlockSpec((bm, h), lambda i, j: (i, 0)),
        out_shape=jax.ShapeDtypeStruct((t, h), jnp.float32),
        scratch_shapes=[pltpu.VMEM((bm, h), jnp.float32)],
        compiler_params=_cparams("parallel", "arbitrary"),
    )(x, w_gate, w_up, w_down)


# ----------------------------- MoE experts (scalar-prefetch skip + shared fusion) -----------------------------
def _moe_kernel(flags_ref, x_ref, shared_ref, wg_ref, wu_ref, wd_ref, rw_ref,
                o_ref, acc_ref):
    e = pl.program_id(1)

    @pl.when(e == 0)
    def _():
        # initialize the accumulator with the shared-experts output (fuses the final add)
        acc_ref[...] = shared_ref[...]

    @pl.when(flags_ref[e] > 0)                  # skip experts with no routed tokens
    def _():
        xb = x_ref[...].astype(jnp.bfloat16)
        gate = jnp.dot(xb, wg_ref[0], preferred_element_type=jnp.float32)
        up = jnp.dot(xb, wu_ref[0], preferred_element_type=jnp.float32)
        act = gate * jax.nn.sigmoid(gate) * up
        y = jnp.dot(act.astype(jnp.bfloat16), wd_ref[0],
                    preferred_element_type=jnp.float32)
        acc_ref[...] += rw_ref[0] * y           # rw_ref[0]: [bm, 1] per-token routing weight

    @pl.when(e == pl.num_programs(1) - 1)
    def _():
        o_ref[...] = acc_ref[...]               # single lane-dense store


def moe_experts(x, shared, w_gate, w_up, w_down, routing_weights, expert_flags):
    """x [T,H]; shared [T,H]; w_gate/w_up [E,H,I] bf16; w_down [E,I,H] bf16;
    routing_weights dense [T,E] f32 (0 for unselected); expert_flags [E] int32."""
    t, h = x.shape
    e_cnt, _, inter = w_gate.shape
    bm = _pick_tile(t)
    rw = routing_weights.T.reshape(e_cnt, t, 1)
    grid_spec = pltpu.PrefetchScalarGridSpec(
        num_scalar_prefetch=1,
        grid=(t // bm, e_cnt),
        in_specs=[pl.BlockSpec((bm, h), lambda i, e, flags: (i, 0)),
                  pl.BlockSpec((bm, h), lambda i, e, flags: (i, 0)),
                  pl.BlockSpec((1, h, inter), lambda i, e, flags: (e, 0, 0)),
                  pl.BlockSpec((1, h, inter), lambda i, e, flags: (e, 0, 0)),
                  pl.BlockSpec((1, inter, h), lambda i, e, flags: (e, 0, 0)),
                  pl.BlockSpec((1, bm, 1), lambda i, e, flags: (e, i, 0))],
        out_specs=pl.BlockSpec((bm, h), lambda i, e, flags: (i, 0)),
        scratch_shapes=[pltpu.VMEM((bm, h), jnp.float32)],
    )
    return pl.pallas_call(
        _moe_kernel,
        grid_spec=grid_spec,
        out_shape=jax.ShapeDtypeStruct((t, h), jnp.float32),
        compiler_params=_cparams("parallel", "arbitrary"),
    )(expert_flags, x, shared, w_gate, w_up, w_down, rw)


# ----------------------------- plain-JAX glue -----------------------------
def rope_tables(positions, head_dim, theta):
    half = head_dim // 2
    inv_freq = 1.0 / (theta ** (jnp.arange(half, dtype=jnp.float32) / half))
    freqs = positions.astype(jnp.float32)[:, None] * inv_freq[None, :]     # [T, hd/2]
    cos = jnp.cos(freqs)
    sin = jnp.sin(freqs)
    # neox-style: duplicate over both halves
    return jnp.concatenate([cos, cos], axis=-1), jnp.concatenate([sin, sin], axis=-1)


def build_rope_inputs(positions, head_dim, num_heads, num_kv_heads, theta):
    """cos/sin tables tiled over the packed [q|k|v] lane layout + signed rotate-half matrix."""
    t = positions.shape[0]
    cos_h, sin_h = rope_tables(positions, head_dim, theta)                 # [T, hd]
    q_size = num_heads * head_dim
    kv_size = num_kv_heads * head_dim
    width = q_size + 2 * kv_size
    cos_w = jnp.concatenate([jnp.tile(cos_h, (1, num_heads)),
                             jnp.tile(cos_h, (1, num_kv_heads)),
                             jnp.ones((t, kv_size), jnp.float32)], axis=-1)
    sin_w = jnp.concatenate([jnp.tile(sin_h, (1, num_heads)),
                             jnp.tile(sin_h, (1, num_kv_heads)),
                             jnp.zeros((t, kv_size), jnp.float32)], axis=-1)
    # per-head signed rotate-half: rot(x)[l] = -x[l+hd/2] (first half) / x[l-hd/2] (second half)
    half = head_dim // 2
    idx = jnp.arange(half)
    rh = jnp.zeros((head_dim, head_dim), jnp.float32)
    rh = rh.at[idx + half, idx].set(-1.0)
    rh = rh.at[idx, idx + half].set(1.0)
    rot = jnp.zeros((width, width), jnp.float32)
    for hh in range(num_heads + num_kv_heads):          # block-diag over q + k heads, 0 over v
        rot = rot.at[hh * head_dim:(hh + 1) * head_dim,
                     hh * head_dim:(hh + 1) * head_dim].set(rh)
    return cos_w, sin_w, rot


def topk_routing_weights(router_logits, top_k, renormalize):
    probs = jax.nn.softmax(router_logits.astype(jnp.float32), axis=-1)     # [T, E]
    topk_w, topk_idx = lax.top_k(probs, top_k)
    if renormalize:
        topk_w = topk_w / jnp.sum(topk_w, axis=-1, keepdims=True)
    onehot = jax.nn.one_hot(topk_idx, probs.shape[-1], dtype=jnp.float32)  # [T, k, E]
    dense = jnp.einsum("tk,tke->te", topk_w, onehot)                       # [T, E]
    flags = jnp.any(dense > 0, axis=0).astype(jnp.int32)                   # [E]
    return dense, flags


def init_params(cfg, key):
    keys = iter(jax.random.split(key, 256))

    def w(shape, scale=0.05):
        return (scale * jax.random.normal(next(keys), shape, jnp.float32)
                ).astype(jnp.bfloat16)                                     # bf16 MXU weights

    nh, nkv = cfg.num_attention_heads, cfg.num_key_value_heads
    hd = cfg.hidden_size // nh
    H = cfg.hidden_size
    params = {
        "embed": 0.02 * jax.random.normal(next(keys), (cfg.vocab_size, H), jnp.float32),
        "final_norm": jnp.ones((H,), jnp.float32),
        "layers": [],
    }
    for layer_idx in range(cfg.num_hidden_layers):
        is_moe = (cfg.n_routed_experts is not None
                  and layer_idx >= cfg.first_k_dense_replace
                  and layer_idx % cfg.moe_layer_freq == 0)
        lp = {
            "is_moe": is_moe,
            "qkv_t": w((H, (nh + 2 * nkv) * hd)),
            "o_t": w((nh * hd, H)),
            "input_ln": jnp.ones((H,), jnp.float32),
            "post_ln": jnp.ones((H,), jnp.float32),
        }
        if is_moe:
            mi = cfg.moe_intermediate_size
            lp["router_t"] = w((H, cfg.n_routed_experts))
            lp["w_gate"] = w((cfg.n_routed_experts, H, mi))
            lp["w_up"] = w((cfg.n_routed_experts, H, mi))
            lp["w_down"] = w((cfg.n_routed_experts, mi, H))
            si = mi * cfg.n_shared_experts
            lp["shared_gate_t"] = w((H, si))
            lp["shared_up_t"] = w((H, si))
            lp["shared_down_t"] = w((si, H))
        else:
            inter = cfg.intermediate_size
            lp["mlp_gate_t"] = w((H, inter))
            lp["mlp_up_t"] = w((H, inter))
            lp["mlp_down_t"] = w((inter, H))
        params["layers"].append(lp)
    return params


def deepseek_forward(params, input_ids, positions, cfg):
    nh, nkv = cfg.num_attention_heads, cfg.num_key_value_heads
    hd = cfg.hidden_size // nh
    q_size, kv_size = nh * hd, nkv * hd

    h = params["embed"][input_ids]                        # embedding gather (glue)
    cos_w, sin_w, rot = build_rope_inputs(positions, hd, nh, nkv, cfg.rope_theta)

    residual = None
    for lp in params["layers"]:
        # input layernorm (+ residual add)
        if residual is None:
            residual = h
            h = rmsnorm(h, lp["input_ln"], cfg.rms_norm_eps)
        else:
            h, residual = fused_add_rmsnorm(h, residual, lp["input_ln"], cfg.rms_norm_eps)

        # self attention (token-major throughout; RoPE applied once to q/k)
        qkv = linear(h, lp["qkv_t"])
        q, kv = apply_rope_qkv(qkv, cos_w, sin_w, rot, q_size, kv_size)
        attn_out = attention(q, kv, nh, nkv, hd)
        h = linear(attn_out, lp["o_t"])

        # post-attention layernorm
        h, residual = fused_add_rmsnorm(h, residual, lp["post_ln"], cfg.rms_norm_eps)

        # MLP / MoE
        if lp["is_moe"]:
            shared = mlp(h, lp["shared_gate_t"], lp["shared_up_t"], lp["shared_down_t"])
            router_logits = linear(h, lp["router_t"])
            rw, flags = topk_routing_weights(router_logits, cfg.num_experts_per_tok,
                                             cfg.norm_topk_prob)
            h = moe_experts(h, shared, lp["w_gate"], lp["w_up"], lp["w_down"], rw, flags)
        else:
            h = mlp(h, lp["mlp_gate_t"], lp["mlp_up_t"], lp["mlp_down_t"])

    # final norm (fused add with residual, as in vLLM RMSNorm)
    h, _ = fused_add_rmsnorm(h, residual, params["final_norm"], cfg.rms_norm_eps)
    return h


# ----------------------------- main -----------------------------
if __name__ == "__main__":
    cfg = Cfg()
    T = 8
    key = jax.random.PRNGKey(0)
    k_ids, k_params = jax.random.split(key)
    input_ids = jax.random.randint(k_ids, (T,), 0, cfg.vocab_size)
    positions = jnp.arange(T, dtype=jnp.int32)

    params = init_params(cfg, k_params)
    hidden_states = deepseek_forward(params, input_ids, positions, cfg)
    hidden_states = jax.block_until_ready(hidden_states)
    assert hidden_states.shape == (T, cfg.hidden_size)
    assert bool(jnp.all(jnp.isfinite(hidden_states)))
    print("KERNEL_OK")
</pallas_src>

<mosaic_0001>
module attributes {stable_mosaic.version = 11 : i64} {
  func.func @_rmsnorm_kernel(%arg0: memref<8x128xf32, #tpu.memory_space<vmem>>, %arg1: memref<1x128xf32, #tpu.memory_space<vmem>>, %arg2: memref<8x128xf32, #tpu.memory_space<vmem>>) attributes {dimension_semantics = [], scalar_prefetch = 0 : i64, scratch_operands = 0 : i64, tpu.core_type = #tpu.core_type<tc>} {
    %c0 = arith.constant 0 : index
    %c0_0 = arith.constant 0 : index
    %0 = vector.load %arg0[%c0, %c0_0] : memref<8x128xf32, #tpu.memory_space<vmem>>, vector<8x128xf32>
    %1 = arith.mulf %0, %0 : vector<8x128xf32>
    %cst = arith.constant dense<0.000000e+00> : vector<8xf32>
    %2 = vector.multi_reduction <add>, %1, %cst [1] : vector<8x128xf32> to vector<8xf32>
    %3 = vector.shape_cast %2 : vector<8xf32> to vector<8x1xf32>
    %cst_1 = arith.constant 1.280000e+02 : f32
    %4 = vector.broadcast %cst_1 : f32 to vector<8x1xf32>
    %5 = arith.divf %3, %4 : vector<8x1xf32>
    %cst_2 = arith.constant 9.99999997E-7 : f32
    %6 = vector.broadcast %cst_2 : f32 to vector<8x1xf32>
    %7 = arith.addf %5, %6 : vector<8x1xf32>
    %8 = math.rsqrt %7 : vector<8x1xf32>
    %9 = vector.broadcast %8 : vector<8x1xf32> to vector<8x128xf32>
    %10 = arith.mulf %0, %9 : vector<8x128xf32>
    %c0_3 = arith.constant 0 : index
    %c0_4 = arith.constant 0 : index
    %11 = vector.load %arg1[%c0_3, %c0_4] : memref<1x128xf32, #tpu.memory_space<vmem>>, vector<1x128xf32>
    %12 = vector.broadcast %11 : vector<1x128xf32> to vector<8x128xf32>
    %13 = arith.mulf %10, %12 : vector<8x128xf32>
    %c0_5 = arith.constant 0 : index
    %c0_6 = arith.constant 0 : index
    %14 = vector.load %arg2[%c0_5, %c0_6] : memref<8x128xf32, #tpu.memory_space<vmem>>, vector<8x128xf32>
    tpu.vector_store %arg2[%c0_5, %c0_6], %13 {strides = array<i32>} : memref<8x128xf32, #tpu.memory_space<vmem>>, vector<8x128xf32>,
    return
  }
}

</mosaic_0001>

<llo_original>
// kernel: tpu_custom_call.1
$region0: #{tpu_custom_call.1}
  #allocation0 [shape = 'u32[]', space=smem, size = 0x4, offset = 0x4, fixed_abs, tag = 'smem constant byte address 0x4 - core index']
  #allocation1 [shape = 'u32[144,128]{1,0:T(1,128)}', space=vmem, size = 0x12000, scoped, tag = 'internal scratch']
  %s0 = inlined_call_operand.hbm [shape: f32[8,128], index: 0, kind: input, shape index: {}]
  %s1 = inlined_call_operand.vmem [shape: f32[1,128], index: 1, kind: input, shape index: {}]
  %s2 = inlined_call_operand.hbm [shape: f32[8,128], index: 2, kind: output, shape index: {}]
  %s3 = sld [smem:[#allocation0]]
  $region22: #{tpu_custom_call.1} parent=0
    _
  %s5 = ssub.s32 1, %s3
  %s6 = scalar_select 0, %s5, %s3
  $region1: #{tpu_custom_call.1} parent=0
    #allocation2 [shape = 'u8[4096]{0}', space=vmem, size = 0x1000, scoped, tag = 'input window, operand 0, single buffered']
    #allocation3 [shape = 's32[1]{0}', space=sflag, size = 0x4, scoped, tag = 'scoped memory for tpu_custom_call.1']
    #allocation4 [shape = 's32[1]{0}', space=sflag, size = 0x4, scoped, tag = 'scoped memory for tpu_custom_call.1']
    #allocation5 [shape = 'u8[4096]{0}', space=vmem, size = 0x1000, scoped, tag = 'output window, operand 0, single buffered']
    %7 = vsyncpa [#allocation3], 0
    %8 = vsyncpa [#allocation4], 0
    // Predicated region
    $region2: #{tpu_custom_call.1} parent=1 // pred_check
      _
    $region3: #{tpu_custom_call.1} parent=1 // pred_check_branch
      %10 = sbr.rel (0) target = $region5
    $region4: #{tpu_custom_call.1} parent=1 // pred_region
      %s12 = ssub.s32 128, 128
      %13 = vsyncadd [#allocation3], %s12
      %s15 = sshll.u32 [#allocation2], 4
      %s16 = int_to_ptr.vmem [resolvable:$true] %s15
      %18 = dma.hbm_to_vmem [thread:$0]  %s0, 128, %s16, [#allocation3]
    $region5: #{tpu_custom_call.1} parent=1 // pred_fallthru
      _
    // Predicated region
    $region6: #{tpu_custom_call.1} parent=1 // pred_check
      _
    $region7: #{tpu_custom_call.1} parent=1 // pred_check_branch
      %20 = sbr.rel (0) target = $region9
    $region8: #{tpu_custom_call.1} parent=1 // pred_region
      _
    $region9: #{tpu_custom_call.1} parent=1 // pred_fallthru
      _
    // Predicated region
    $region10: #{tpu_custom_call.1} parent=1 // pred_check
      _
    $region11: #{tpu_custom_call.1} parent=1 // pred_check_branch
      %22 = sbr.rel (0) target = $region13
    $region12: #{tpu_custom_call.1} parent=1 // pred_region
      %23 = dma.done [#allocation3], 128
    $region13: #{tpu_custom_call.1} parent=1 // pred_fallthru
      _
    %v24 = vld [vmem:[#allocation2] sm:$0xff]
    %v25 = vmul.f32 %v24, %v24
    %26 = vadd.xlane.f32.xlu0 %v25
    %v27 = vpop.xlane.xlu0 %26
    %v28 = vrcp.pop 128.0
    %v29 = vmul.f32 %v27, %v28
    %v30 = vadd.f32 %v29, 1e-06
    %v31 = vrsqrt.pop %v30
    %v32 = vmul.f32 %v24, %v31
    %v33 = vld [vmem:[%s1] sm:$0x1]
    %v35 = vlaneseq
    %v36 = vshrl.u32 %v35, 7
    %v37 = vsub.s32 0, %v36
    %v38 = vrot.slane %v33, %v37
    %v40 = vmul.f32 %v32, %v38
    %41 = vst [vmem:[#allocation5] sm:$0xff] %v40
    // Predicated region
    $region14: #{tpu_custom_call.1} parent=1 // pred_check
      _
    $region15: #{tpu_custom_call.1} parent=1 // pred_check_branch
      %43 = sbr.rel (0) target = $region17
    $region16: #{tpu_custom_call.1} parent=1 // pred_region
      %s45 = ssub.s32 128, 128
      %46 = vsyncadd [#allocation4], %s45
      %s48 = sshll.u32 [#allocation5], 4
      %s49 = int_to_ptr.vmem [resolvable:$true] %s48
      %51 = dma.vmem_to_hbm [thread:$0]  %s49, 128, %s2, [#allocation4]
    $region17: #{tpu_custom_call.1} parent=1 // pred_fallthru
      _
    // Predicated region
    $region18: #{tpu_custom_call.1} parent=1 // pred_check
      _
    $region19: #{tpu_custom_call.1} parent=1 // pred_check_branch
      %53 = sbr.rel (0) target = $region21
    $region20: #{tpu_custom_call.1} parent=1 // pred_region
      %54 = dma.done [#allocation4], 128
    $region21: #{tpu_custom_call.1} parent=1 // pred_fallthru
      _
    %55 = vsyncpa [#allocation3], 1
    %56 = vsyncpa [#allocation4], 1

</llo_original>
